<compile_context>
chip_gen: v5e
topology: v5e:2x2
jax: 0.10.0
libtpu: 0.0.40
codegen_flags: <defaults>
</compile_context>

<pallas_src>
import functools

import jax
import jax.numpy as jnp
from jax import lax
from jax.experimental import pallas as pl
from jax.experimental.pallas import tpu as pltpu


def _round_up(a, m):
    return ((a + m - 1) // m) * m


def _vmem_bytes(tm, f_in, n_maps, f_out):
    """Rough double-buffered working-set estimate (bytes) for one grid step."""
    f_cat = n_maps * f_out
    per_step = 2 * tm * (128 + f_in + f_out) * 4   # z (lane-padded to 128), x, y
    tables = 2 * (f_in * f_cat + f_cat) * 4        # resident W_cat + b_cat buffers
    temps = tm * (f_cat + 2 * f_out) * 4           # y_all, acc, select temporaries
    return per_step + tables + temps + (2 << 20)   # + compiler scratch slack


def _local_map_kernel(z_ref, x_ref, w_ref, b_ref, y_ref, *,
                      n_maps, f_out, t_total, tm, precision):
    # z_ref: (tm, 1)            int32  token labels (-1 == "no map")
    # x_ref: (tm, F_in)         float  token features
    # w_ref: (F_in, N*F_out)    float  per-label weights, concatenated on F_out
    # b_ref: (1, N*F_out)       float  per-label biases,  concatenated on F_out
    # y_ref: (tm, F_out)        float  output block
    z = z_ref[...]                                      # (tm, 1)
    x = x_ref[...]                                      # (tm, F_in)

    # Single lane-dense matmul for all labels at once; bias folded as one add.
    y_all = jnp.dot(x, w_ref[...], preferred_element_type=jnp.float32,
                    precision=precision)                # (tm, N*F_out) f32
    y_all = y_all + b_ref[...].astype(jnp.float32)

    # Mutually-exclusive per-label selection, applied only on the (tm, F_out)
    # matmul output. Rows with z == -1 (or any label not in [0, N)) stay zero.
    acc = jnp.zeros((tm, f_out), jnp.float32)
    for n in range(n_maps):                             # N is small & static
        acc = acc + jnp.where(z == n, y_all[:, n * f_out:(n + 1) * f_out], 0.0)

    if t_total % tm != 0:
        # Ragged tail: zero rows whose global token index is past T so the
        # partial last block never exposes garbage from out-of-bounds reads.
        row = pl.program_id(0) * tm + lax.broadcasted_iota(jnp.int32, (tm, 1), 0)
        acc = jnp.where(row < t_total, acc, 0.0)

    y_ref[...] = acc.astype(y_ref.dtype)


def local_map(z, x, map_weights, map_biases, *, tm=4096, precision=None):
    """Pallas implementation of LocalMap.forward(z, x) -> (z, y).

    z:           [B, S] int labels, -1 means "leave output row at zero".
    x:           [B, S, F_in] features.
    map_weights: [N, F_in, F_out] stacked per-label Linear weights.
    map_biases:  [N, F_out]       stacked per-label Linear biases.
    precision:   lax.Precision for the matmul (None -> DEFAULT single-pass MXU).
    """
    B, S = z.shape
    assert x.shape[:2] == (B, S)
    F_in = x.shape[2]
    N, F_in_w, F_out = map_weights.shape
    assert F_in_w == F_in and map_biases.shape == (N, F_out)
    # NOTE: labels outside [-1, N-1] would raise in the PyTorch loop; here they
    # silently yield zero rows (same as -1).

    T = B * S

    # Token tile: large enough to amortize per-grid-step overhead, multiple of
    # 8 (sublane), capped so the grid keeps >= 2 steps (v7x shards the
    # "parallel" axis across its 2 TensorCores), shrunk if the double-buffered
    # working set would exceed a budget that is safe on every generation's
    # scoped-VMEM default (v5e 16 MiB / v6e 32 MiB / v7x 32-of-64 MiB).
    tm_eff = max(8, min(_round_up(tm, 8), _round_up(T, 8)))
    if T > 8:
        tm_eff = min(tm_eff, max(8, _round_up(pl.cdiv(T, 2), 8)))
    while tm_eff > 64 and _vmem_bytes(tm_eff, F_in, N, F_out) > (20 << 20):
        tm_eff = max(64, _round_up(tm_eff // 2, 8))

    grid = (pl.cdiv(T, tm_eff),)

    z_flat = z.reshape(T, 1).astype(jnp.int32)
    x_flat = x.reshape(T, F_in)

    # Tiny table rewrites (done once, outside the kernel): concatenate the
    # per-label weights/biases along the output axis for the lane-dense matmul.
    w_cat = jnp.transpose(map_weights, (1, 0, 2)).reshape(F_in, N * F_out)
    b_cat = map_biases.reshape(1, N * F_out)

    kernel = functools.partial(_local_map_kernel, n_maps=N, f_out=F_out,
                               t_total=T, tm=tm_eff, precision=precision)

    cp_kwargs = dict(dimension_semantics=("parallel",))
    est = _vmem_bytes(tm_eff, F_in, N, F_out)
    if est > (12 << 20):
        # Generation-safe ceiling: stays well under v7x's 64 MiB physical VMEM.
        cp_kwargs["vmem_limit_bytes"] = int(min(est + (8 << 20), 36 << 20))

    y_flat = pl.pallas_call(
        kernel,
        out_shape=jax.ShapeDtypeStruct((T, F_out), x.dtype),
        grid_spec=pltpu.PrefetchScalarGridSpec(
            num_scalar_prefetch=0,
            grid=grid,
            in_specs=[
                pl.BlockSpec((tm_eff, 1), lambda i: (i, 0)),        # z block
                pl.BlockSpec((tm_eff, F_in), lambda i: (i, 0)),     # x block
                pl.BlockSpec((F_in, N * F_out), lambda i: (0, 0)),  # W_cat (resident)
                pl.BlockSpec((1, N * F_out), lambda i: (0, 0)),     # b_cat (resident)
            ],
            out_specs=pl.BlockSpec((tm_eff, F_out), lambda i: (i, 0)),
        ),
        compiler_params=pltpu.CompilerParams(**cp_kwargs),
    )(z_flat, x_flat, w_cat, b_cat)

    y = y_flat.reshape(B, S, F_out)
    return z, y


if __name__ == "__main__":
    # Small, module-consistent shapes.
    B, S = 2, 8           # batch, tokens per sample
    N = 4                 # number of per-label maps (len(map_list))
    F_in, F_out = 32, 32  # per-token feature size, output_size

    key = jax.random.PRNGKey(0)
    k_w, k_b, k_z, k_x = jax.random.split(key, 4)

    # Deterministic synthetic per-label Linear maps (stand-in for map_list).
    W = 0.1 * jax.random.normal(k_w, (N, F_in, F_out), dtype=jnp.float32)
    b = 0.1 * jax.random.normal(k_b, (N, F_out), dtype=jnp.float32)
    # Labels in [-1, N-1]; -1 rows must come out exactly zero.
    z = jax.random.randint(k_z, (B, S), minval=-1, maxval=N, dtype=jnp.int32)
    x = jax.random.normal(k_x, (B, S, F_in), dtype=jnp.float32)

    z_out, y = local_map(z, x, W, b)
    jax.block_until_ready(y)

    # Pure-JAX reference with the same semantics as the PyTorch loop,
    # computed at HIGHEST precision (near-true f32).
    zf = z.reshape(-1)
    xf = x.reshape(-1, F_in)
    valid = zf >= 0
    zc = jnp.where(valid, zf, 0)
    y_ref = jnp.einsum("tf,tfo->to", xf, W[zc],
                       precision=lax.Precision.HIGHEST) + b[zc]
    y_ref = jnp.where(valid[:, None], y_ref, 0.0).reshape(B, S, F_out)

    assert z_out.shape == z.shape and bool(jnp.all(z_out == z))
    assert y.shape == (B, S, F_out) and y.dtype == x.dtype
    # Rows with z == -1 are exactly zero (selection happens after the matmul).
    assert bool(jnp.all(jnp.where((z < 0)[..., None], y == 0, True)))
    # Whole result matches the reference up to single-pass-MXU (bf16) rounding.
    assert jnp.allclose(y, y_ref, atol=2e-2, rtol=2e-2)

    print("KERNEL_OK")
</pallas_src>

<mosaic_0001>
module attributes {stable_mosaic.version = 11 : i64} {
  func.func @_local_map_kernel(%arg0: i32, %arg1: memref<8x1xi32, #tpu.memory_space<vmem>>, %arg2: memref<8x32xf32, #tpu.memory_space<vmem>>, %arg3: memref<32x128xf32, #tpu.memory_space<vmem>>, %arg4: memref<1x128xf32, #tpu.memory_space<vmem>>, %arg5: memref<8x32xf32, #tpu.memory_space<vmem>>) attributes {dimension_semantics = [#tpu.dimension_semantics<parallel>], iteration_bounds = array<i64: 2>, scalar_prefetch = 0 : i64, scratch_operands = 0 : i64, tpu.core_type = #tpu.core_type<tc>, window_params = [{transform_indices = @transform_0, window_bounds = array<i64: 8, 1>}, {transform_indices = @transform_1, window_bounds = array<i64: 8, 32>}, {pipeline_mode = #tpu.pipeline_mode<synchronous>, transform_indices = @transform_2, window_bounds = array<i64: 32, 128>}, {pipeline_mode = #tpu.pipeline_mode<synchronous>, transform_indices = @transform_3, window_bounds = array<i64: 1, 128>}, {transform_indices = @transform_4, window_bounds = array<i64: 8, 32>}]} {
    %c0 = arith.constant 0 : index
    %c0_0 = arith.constant 0 : index
    %0 = vector.load %arg1[%c0, %c0_0] : memref<8x1xi32, #tpu.memory_space<vmem>>, vector<8x1xi32>
    %c0_1 = arith.constant 0 : index
    %c0_2 = arith.constant 0 : index
    %1 = vector.load %arg2[%c0_1, %c0_2] : memref<8x32xf32, #tpu.memory_space<vmem>>, vector<8x32xf32>
    %c0_3 = arith.constant 0 : index
    %c0_4 = arith.constant 0 : index
    %2 = vector.load %arg3[%c0_3, %c0_4] : memref<32x128xf32, #tpu.memory_space<vmem>>, vector<32x128xf32>
    %cst = arith.constant dense<0.000000e+00> : vector<8x128xf32>
    %3 = tpu.matmul %1, %2, %cst {dimension_numbers = #tpu.dot_dimension_numbers<[1], [0], [0], [1], [0, 0, 1, 1], [], []>} : vector<8x32xf32>, vector<32x128xf32>, vector<8x128xf32> -> vector<8x128xf32>
    %c0_5 = arith.constant 0 : index
    %c0_6 = arith.constant 0 : index
    %4 = vector.load %arg4[%c0_5, %c0_6] : memref<1x128xf32, #tpu.memory_space<vmem>>, vector<1x128xf32>
    %5 = vector.broadcast %4 : vector<1x128xf32> to vector<8x128xf32>
    %6 = arith.addf %3, %5 : vector<8x128xf32>
    %cst_7 = arith.constant 0.000000e+00 : f32
    %7 = vector.broadcast %cst_7 : f32 to vector<8x32xf32>
    %c0_i32 = arith.constant 0 : i32
    %8 = vector.broadcast %c0_i32 : i32 to vector<8x1xi32>
    %9 = arith.cmpi eq, %0, %8 : vector<8x1xi32>
    %10 = vector.extract_strided_slice %6 {offsets = [0, 0], sizes = [8, 32], strides = [1, 1]} : vector<8x128xf32> to vector<8x32xf32>
    %cst_8 = arith.constant 0.000000e+00 : f32
    %11 = vector.shape_cast %9 : vector<8x1xi1> to vector<8x1xi1>
    %12 = vector.broadcast %11 : vector<8x1xi1> to vector<8x32xi1>
    %13 = vector.broadcast %cst_8 : f32 to vector<8x32xf32>
    %14 = arith.select %12, %10, %13 : vector<8x32xi1>, vector<8x32xf32>
    %15 = arith.addf %7, %14 : vector<8x32xf32>
    %c1_i32 = arith.constant 1 : i32
    %16 = vector.broadcast %c1_i32 : i32 to vector<8x1xi32>
    %17 = arith.cmpi eq, %0, %16 : vector<8x1xi32>
    %18 = vector.extract_strided_slice %6 {offsets = [0, 32], sizes = [8, 32], strides = [1, 1]} : vector<8x128xf32> to vector<8x32xf32>
    %cst_9 = arith.constant 0.000000e+00 : f32
    %19 = vector.shape_cast %17 : vector<8x1xi1> to vector<8x1xi1>
    %20 = vector.broadcast %19 : vector<8x1xi1> to vector<8x32xi1>
    %21 = vector.broadcast %cst_9 : f32 to vector<8x32xf32>
    %22 = arith.select %20, %18, %21 : vector<8x32xi1>, vector<8x32xf32>
    %23 = arith.addf %15, %22 : vector<8x32xf32>
    %c2_i32 = arith.constant 2 : i32
    %24 = vector.broadcast %c2_i32 : i32 to vector<8x1xi32>
    %25 = arith.cmpi eq, %0, %24 : vector<8x1xi32>
    %26 = vector.extract_strided_slice %6 {offsets = [0, 64], sizes = [8, 32], strides = [1, 1]} : vector<8x128xf32> to vector<8x32xf32>
    %cst_10 = arith.constant 0.000000e+00 : f32
    %27 = vector.shape_cast %25 : vector<8x1xi1> to vector<8x1xi1>
    %28 = vector.broadcast %27 : vector<8x1xi1> to vector<8x32xi1>
    %29 = vector.broadcast %cst_10 : f32 to vector<8x32xf32>
    %30 = arith.select %28, %26, %29 : vector<8x32xi1>, vector<8x32xf32>
    %31 = arith.addf %23, %30 : vector<8x32xf32>
    %c3_i32 = arith.constant 3 : i32
    %32 = vector.broadcast %c3_i32 : i32 to vector<8x1xi32>
    %33 = arith.cmpi eq, %0, %32 : vector<8x1xi32>
    %34 = vector.extract_strided_slice %6 {offsets = [0, 96], sizes = [8, 32], strides = [1, 1]} : vector<8x128xf32> to vector<8x32xf32>
    %cst_11 = arith.constant 0.000000e+00 : f32
    %35 = vector.shape_cast %33 : vector<8x1xi1> to vector<8x1xi1>
    %36 = vector.broadcast %35 : vector<8x1xi1> to vector<8x32xi1>
    %37 = vector.broadcast %cst_11 : f32 to vector<8x32xf32>
    %38 = arith.select %36, %34, %37 : vector<8x32xi1>, vector<8x32xf32>
    %39 = arith.addf %31, %38 : vector<8x32xf32>
    %c0_12 = arith.constant 0 : index
    %c0_13 = arith.constant 0 : index
    %40 = vector.load %arg5[%c0_12, %c0_13] : memref<8x32xf32, #tpu.memory_space<vmem>>, vector<8x32xf32>
    tpu.vector_store %arg5[%c0_12, %c0_13], %39 {strides = array<i32>} : memref<8x32xf32, #tpu.memory_space<vmem>>, vector<8x32xf32>,
    return
  }
  func.func @transform_0(%arg0: i32) -> (i32, i32) {
    %c0_i32 = arith.constant 0 : i32
    %c0_i32_0 = arith.constant 0 : i32
    return %arg0, %c0_i32 : i32, i32
  }
  func.func @transform_1(%arg0: i32) -> (i32, i32) {
    %c0_i32 = arith.constant 0 : i32
    %c0_i32_0 = arith.constant 0 : i32
    return %arg0, %c0_i32 : i32, i32
  }
  func.func @transform_2(%arg0: i32) -> (i32, i32) {
    %c0_i32 = arith.constant 0 : i32
    %c0_i32_0 = arith.constant 0 : i32
    %c0_i32_1 = arith.constant 0 : i32
    return %c0_i32, %c0_i32_0 : i32, i32
  }
  func.func @transform_3(%arg0: i32) -> (i32, i32) {
    %c0_i32 = arith.constant 0 : i32
    %c0_i32_0 = arith.constant 0 : i32
    %c0_i32_1 = arith.constant 0 : i32
    return %c0_i32, %c0_i32_0 : i32, i32
  }
  func.func @transform_4(%arg0: i32) -> (i32, i32) {
    %c0_i32 = arith.constant 0 : i32
    %c0_i32_0 = arith.constant 0 : i32
    return %arg0, %c0_i32 : i32, i32
  }
}

</mosaic_0001>

<llo_original>
// kernel: tpu_custom_call.1
$region0: #{tpu_custom_call.1}
  #allocation0 [shape = 'u32[]', space=smem, size = 0x4, offset = 0x4, fixed_abs, tag = 'smem constant byte address 0x4 - core index']
  #allocation1 [shape = 'u32[72,128]{1,0:T(1,128)}', space=vmem, size = 0x9000, scoped, tag = 'internal scratch']
  %s0 = inlined_call_operand.vmem [shape: s32[16,1], index: 0, kind: input, shape index: {}]
  %s1 = inlined_call_operand.vmem [shape: f32[16,32], index: 1, kind: input, shape index: {}]
  %s2 = inlined_call_operand.hbm [shape: f32[32,128], index: 2, kind: input, shape index: {}]
  %s3 = inlined_call_operand.vmem [shape: f32[1,128], index: 3, kind: input, shape index: {}]
  %s4 = inlined_call_operand.hbm [shape: f32[16,32], index: 4, kind: output, shape index: {}]
  %s5 = sld [smem:[#allocation0]]
  $region53: #{tpu_custom_call.1} parent=0
    _
  %s7 = ssub.s32 1, %s5
  %s8 = scalar_select 0, %s7, %s5
  $region1: #{tpu_custom_call.1} parent=0
    #allocation2 [shape = 'u8[16384]{0}', space=vmem, size = 0x4000, scoped, tag = 'input window, operand 2, single buffered']
    #allocation3 [shape = 's32[2]{0}', space=sflag, size = 0x8, scoped, tag = 'scoped memory for tpu_custom_call.1']
    #allocation4 [shape = 's32[2]{0}', space=sflag, size = 0x8, scoped, tag = 'scoped memory for tpu_custom_call.1']
    #allocation5 [shape = 'u8[8192]{0}', space=vmem, size = 0x2000, scoped, tag = 'output window, operand 0']
    %9 = vsyncpa [#allocation3], 0
    %10 = vsyncpa [#allocation4], 0
    %s11 = scalar_lea.sflag [#allocation4], 1
    %12 = vsyncpa %s11, 0
    loop: start=0, step=1, limit=4
    $region2: #{tpu_custom_call.1} parent=1 // loop_pre_header
      _
    $region3: #{tpu_custom_call.1} parent=1 // loop_header
      %s14 = sphi 0, %s18
      %p15 = scmp.ge.s32.totalorder %s14, 4
      %s24 = sphi 0, %s26
      %s27 = sphi 0, %s24
      %s28 = sphi 0, %s27
      %s44 = sphi 0, %s28
      %s50 = sphi 0, %s52
      %s53 = sphi 0, %s50
      %s54 = sphi 0, %s53
      %s70 = sphi 0, %s54
      %s74 = sphi 0, %s74
      %s76 = sphi 0, %s74
      %s77 = sphi 0, %s76
      %s91 = sphi 0, %s77
      %s95 = sphi 0, %s95
      %s97 = sphi 0, %s95
      %s98 = sphi 0, %s97
      %s112 = sphi 0, %s98
      %s118 = sphi 0, %s120
      %s121 = sphi 0, %s118
      %s122 = sphi 0, %s121
      %s138 = sphi 0, %s122
    $region4: #{tpu_custom_call.1} parent=1 // loop_header_branch
      %17 = sbr.rel (%p15) target = $region8
    $region5: #{tpu_custom_call.1} parent=1 // loop_body
      %s19 = ssub.s32 %s14, 1
      %s20 = ssub.s32 %s14, 2
      %s21 = sadd.s32 %s14, 1
      %s22 = ssub.s32 %s14, %s21
      %p23 = scmp.eq.s32.totalorder %s22, 0
      %s25 = sadd.s32 %s24, 1
      %s26 = scalar_select %p23, %s24, %s25
      %p29 = pneg %p23
      %p30 = scmp.eq.s32.totalorder %s14, 1
      %p31 = por %p29, %p30
      %p32 = scmp.ne.s32.totalorder %s24, %s27
      %p33 = scmp.eq.s32.totalorder %s14, 0
      %p34 = por %p32, %p33
      %p35 = scmp.ne.s32.totalorder %s24, %s27
      %p36 = scmp.eq.s32.totalorder %s19, 1
      %p37 = por %p35, %p36
      %p38 = scmp.ne.s32.totalorder %s27, %s28
      %p39 = scmp.eq.s32.totalorder %s19, 0
      %p40 = por %p38, %p39
      %p41 = scmp.ne.s32.totalorder %s27, %s28
      %p42 = scmp.eq.s32.totalorder %s20, 1
      %p43 = por %p41, %p42
      %p45 = scmp.ne.s32.totalorder %s28, %s44
      %p46 = scmp.eq.s32.totalorder %s20, 0
      %p47 = por %p45, %p46
      %s48 = ssub.s32 %s14, %s21
      %p49 = scmp.eq.s32.totalorder %s48, 0
      %s51 = sadd.s32 %s50, 1
      %s52 = scalar_select %p49, %s50, %s51
      %p55 = pneg %p49
      %p56 = scmp.eq.s32.totalorder %s14, 1
      %p57 = por %p55, %p56
      %p58 = scmp.ne.s32.totalorder %s50, %s53
      %p59 = scmp.eq.s32.totalorder %s14, 0
      %p60 = por %p58, %p59
      %p61 = scmp.ne.s32.totalorder %s50, %s53
      %p62 = scmp.eq.s32.totalorder %s19, 1
      %p63 = por %p61, %p62
      %p64 = scmp.ne.s32.totalorder %s53, %s54
      %p65 = scmp.eq.s32.totalorder %s19, 0
      %p66 = por %p64, %p65
      %p67 = scmp.ne.s32.totalorder %s53, %s54
      %p68 = scmp.eq.s32.totalorder %s20, 1
      %p69 = por %p67, %p68
      %p71 = scmp.ne.s32.totalorder %s54, %s70
      %p72 = scmp.eq.s32.totalorder %s20, 0
      %p73 = por %p71, %p72
      %s75 = sadd.s32 %s74, 1
      %p78 = scmp.eq.s32.totalorder %s14, 1
      %p79 = scmp.ne.s32.totalorder %s74, %s76
      %p80 = scmp.eq.s32.totalorder %s14, 0
      %p81 = por %p79, %p80
      %p82 = scmp.ne.s32.totalorder %s74, %s76
      %p83 = scmp.eq.s32.totalorder %s19, 1
      %p84 = por %p82, %p83
      %p85 = scmp.ne.s32.totalorder %s76, %s77
      %p86 = scmp.eq.s32.totalorder %s19, 0
      %p87 = por %p85, %p86
      %p88 = scmp.ne.s32.totalorder %s76, %s77
      %p89 = scmp.eq.s32.totalorder %s20, 1
      %p90 = por %p88, %p89
      %p92 = scmp.ne.s32.totalorder %s77, %s91
      %p93 = scmp.eq.s32.totalorder %s20, 0
      %p94 = por %p92, %p93
      %s96 = sadd.s32 %s95, 1
      %p99 = scmp.eq.s32.totalorder %s14, 1
      %p100 = scmp.ne.s32.totalorder %s95, %s97
      %p101 = scmp.eq.s32.totalorder %s14, 0
      %p102 = por %p100, %p101
      %p103 = scmp.ne.s32.totalorder %s95, %s97
      %p104 = scmp.eq.s32.totalorder %s19, 1
      %p105 = por %p103, %p104
      %p106 = scmp.ne.s32.totalorder %s97, %s98
      %p107 = scmp.eq.s32.totalorder %s19, 0
      %p108 = por %p106, %p107
      %p109 = scmp.ne.s32.totalorder %s97, %s98
      %p110 = scmp.eq.s32.totalorder %s20, 1
      %p111 = por %p109, %p110
      %p113 = scmp.ne.s32.totalorder %s98, %s112
      %p114 = scmp.eq.s32.totalorder %s20, 0
      %p115 = por %p113, %p114
      %s116 = ssub.s32 %s14, %s21
      %p117 = scmp.eq.s32.totalorder %s116, 0
      %s119 = sadd.s32 %s118, 1
      %s120 = scalar_select %p117, %s118, %s119
      %p123 = pneg %p117
      %p124 = scmp.eq.s32.totalorder %s14, 1
      %p125 = por %p123, %p124
      %p126 = scmp.ne.s32.totalorder %s118, %s121
      %p127 = scmp.eq.s32.totalorder %s14, 0
      %p128 = por %p126, %p127
      %p129 = scmp.ne.s32.totalorder %s118, %s121
      %p130 = scmp.eq.s32.totalorder %s19, 1
      %p131 = por %p129, %p130
      %p132 = scmp.ne.s32.totalorder %s121, %s122
      %p133 = scmp.eq.s32.totalorder %s19, 0
      %p134 = por %p132, %p133
      %p135 = scmp.ne.s32.totalorder %s121, %s122
      %p136 = scmp.eq.s32.totalorder %s20, 1
      %p137 = por %p135, %p136
      %p139 = scmp.ne.s32.totalorder %s122, %s138
      %p140 = scmp.eq.s32.totalorder %s20, 0
      %p141 = por %p139, %p140
      %p142 = scmp.le.s32.totalorder 1, %s14
      %p143 = scmp.lt.s32.totalorder %s14, 3
      %p144 = pnand %p142, %p143
      %p145 = pneg %p144
      // Predicated region
      $region9: #{tpu_custom_call.1} parent=5 // pred_check
        _
      $region10: #{tpu_custom_call.1} parent=5 // pred_check_branch
        %147 = sbr.rel (%p144) target = $region12
      $region11: #{tpu_custom_call.1} parent=5 // pred_region
        %s148 = ssub.s32 %s14, 1
        // Predicated region
        $region13: #{tpu_custom_call.1} parent=11 // pred_check
          %p149 = pneg %p87
        $region14: #{tpu_custom_call.1} parent=11 // pred_check_branch
          %151 = sbr.rel (%p149) target = $region16
        $region15: #{tpu_custom_call.1} parent=11 // pred_region
          %153 = vsyncadd [#allocation3], 0
          %s154 = sshll.u32 %s2, 4
          %s155 = int_to_ptr.hbm [resolvable:$true] %s154
          %s156 = sshll.u32 [#allocation2], 4
          %s157 = int_to_ptr.vmem [resolvable:$true] %s156
          %162 = dma.hbm_to_vmem [thread:$0]  %s155, 512, %s157, [#allocation3], 128, 128, 8
        $region16: #{tpu_custom_call.1} parent=11 // pred_fallthru
          _
        // Predicated region
        $region17: #{tpu_custom_call.1} parent=11 // pred_check
          %p163 = pneg %p108
        $region18: #{tpu_custom_call.1} parent=11 // pred_check_branch
          %165 = sbr.rel (%p163) target = $region20
        $region19: #{tpu_custom_call.1} parent=11 // pred_region
          _
        $region20: #{tpu_custom_call.1} parent=11 // pred_fallthru
          _
      $region12: #{tpu_custom_call.1} parent=5 // pred_fallthru
        _
      %p166 = scmp.lt.s32.totalorder %s14, 2
      // Predicated region
      $region21: #{tpu_custom_call.1} parent=5 // pred_check
        %p167 = pneg %p166
      $region22: #{tpu_custom_call.1} parent=5 // pred_check_branch
        %169 = sbr.rel (%p167) target = $region24
      $region23: #{tpu_custom_call.1} parent=5 // pred_region
        // Predicated region
        $region25: #{tpu_custom_call.1} parent=23 // pred_check
          %p170 = pneg %p34
        $region26: #{tpu_custom_call.1} parent=23 // pred_check_branch
          %172 = sbr.rel (%p170) target = $region28
        $region27: #{tpu_custom_call.1} parent=23 // pred_region
          %p173 = scmp.lt.s32.totalorder %s14, 1
          %s174 = scalar_select %p173, %s14, 1
          %s175 = smul.addr %s174, 8
          %s176 = scalar_lea.vmem %s0, %s175
        $region28: #{tpu_custom_call.1} parent=23 // pred_fallthru
          _
        // Predicated region
        $region29: #{tpu_custom_call.1} parent=23 // pred_check
          %p177 = pneg %p60
        $region30: #{tpu_custom_call.1} parent=23 // pred_check_branch
          %179 = sbr.rel (%p177) target = $region32
        $region31: #{tpu_custom_call.1} parent=23 // pred_region
          %p180 = scmp.lt.s32.totalorder %s14, 1
          %s181 = scalar_select %p180, %s14, 1
          %s182 = smul.addr %s181, 8
          %s183 = scalar_lea.vmem %s1, %s182
        $region32: #{tpu_custom_call.1} parent=23 // pred_fallthru
          _
      $region24: #{tpu_custom_call.1} parent=5 // pred_fallthru
        _
      %p184 = scmp.le.s32.totalorder 1, %s14
      %p185 = scmp.lt.s32.totalorder %s14, 3
      %p186 = pnand %p184, %p185
      %p187 = pneg %p186
      // Predicated region
      $region33: #{tpu_custom_call.1} parent=5 // pred_check
        _
      $region34: #{tpu_custom_call.1} parent=5 // pred_check_branch
        %189 = sbr.rel (%p186) target = $region36
      $region35: #{tpu_custom_call.1} parent=5 // pred_region
        %s190 = ssub.s32 %s14, 1
        // Predicated region
        $region37: #{tpu_custom_call.1} parent=35 // pred_check
          %p191 = pneg %p87
        $region38: #{tpu_custom_call.1} parent=35 // pred_check_branch
          %193 = sbr.rel (%p191) target = $region40
        $region39: #{tpu_custom_call.1} parent=35 // pred_region
          %195 = dma.done [#allocation3], 512
        $region40: #{tpu_custom_call.1} parent=35 // pred_fallthru
          _
        %p196 = scmp.lt.s32.totalorder %s19, 1
        %s197 = scalar_select %p196, %s19, 1
        %s198 = smul.addr %s197, 8
        %s199 = scalar_lea.vmem %s0, %s198
        %p200 = pneg %p40
        %p201 = pneg %p37
        %p202 = scmp.lt.s32.totalorder %s19, 1
        %s203 = scalar_select %p202, %s19, 1
        %s204 = smul.addr %s203, 8
        %s205 = scalar_lea.vmem %s1, %s204
        %p206 = pneg %p66
        %p207 = pneg %p63
        %p208 = pneg %p87
        %p209 = pneg %p84
        %p210 = pneg %p108
        %p211 = pneg %p105
        %p212 = pneg %p134
        %p213 = pneg %p131
        %s214 = sand.u32 %s121, 1
        %s215 = scalar_lea.sflag [#allocation4], %s214
        %s216 = sand.u32 %s121, 1
        %s217 = smul.addr %s216, 8
        %s218 = scalar_lea.vmem [#allocation5], %s217
        %p219 = scmp.lt.s32.totalorder %s19, 1
        %s220 = scalar_select %p219, %s19, 1
        %s221 = smul.addr %s220, 8
        %s222 = scalar_lea.vmem %s0, %s221
        %p223 = scmp.lt.s32.totalorder %s19, 1
        %s224 = scalar_select %p223, %s19, 1
        %s225 = smul.addr %s224, 8
        %s226 = scalar_lea.vmem %s1, %s225
        %v227 = vld [vmem:[%s222] sm:$0xff]
        %v228 = vld [vmem:[%s226] sm:$0xff]
        %v229 = vld [vmem:[#allocation2] sm:$0xff]
        %v230 = vld [vmem:[#allocation2 + $0x8] sm:$0xff]
        %v231 = vld [vmem:[#allocation2 + $0x10] sm:$0xff]
        %v232 = vld [vmem:[#allocation2 + $0x18] sm:$0xff]
        %v233 = vld [vmem:[%s3] sm:$0x1]
        %v235 = vperm.slane %v233, 0
        %vm237 = vcmask 261120
        %v239 = vsel %vm237, %v228, 0
        %241 = vmatpush.msra.mxu0 0.0
        %242 = vmatpush.msra.mxu0 0.0
        %243 = vmatpush.msra.mxu0 0.0
        %244 = vmatpush.msra.mxu0 0.0
        %245 = vmatpush.msra.mxu0 0.0
        %246 = vmatpush.msra.mxu0 0.0
        %247 = vmatpush.msra.mxu0 0.0
        %248 = vmatpush.msra.mxu0 0.0
        %249 = vmatpush.msra.mxu0 0.0
        %250 = vmatpush.msra.mxu0 0.0
        %251 = vmatpush.msra.mxu0 0.0
        %252 = vmatpush.msra.mxu0 0.0
        %253 = vmatpush.msra.mxu0 %v232
        %254 = vmatpush.msra.mxu0 %v231
        %255 = vmatpush.msra.mxu0 %v230
        %256 = vmatpush.msra.mxu0 %v229
        %257 = vmatmul.f32.gmra.mxu0 %v239
        %v258 = vpop.f32.mrf.mxu0
        %v259 = vadd.f32 %v235, %v258
        %260 = vdwg.mxu0
        %vm261 = vcmp.eq.s32.totalorder %v227, 0
        %v262 = vsel %vm261, 1, 0
        %263 = vset.pattern.permute.xlu0 0
        %264 = vperm.xlu0 %263, %v262
        %v265 = vpop.permute.xlu0 %264
        %vm266 = vcmp.eq.s32.totalorder %v265, 1
        %v267 = vsel %vm266, %v259, 0.0
        %v268 = vadd.f32 %v267, 0.0
        %vm269 = vcmp.eq.s32.totalorder %v227, 1
        %v270 = vsel %vm269, 1, 0
        %271 = vset.pattern.permute.xlu0 0
        %272 = vperm.xlu0 %271, %v270
        %v273 = vpop.permute.xlu0 %272
        %vm274 = vcmp.eq.s32.totalorder %v273, 1
        %v275 = vsel %vm274, %v259, 0.0
        %277 = vrot.lane.b32.xlu0 %v275, 96
        %v278 = vpop.permute.xlu0 %277
        %v280 = vadd.f32 %v268, %v278
        %vm281 = vcmp.eq.s32.totalorder %v227, 2
        %v282 = vsel %vm281, 1, 0
        %283 = vset.pattern.permute.xlu0 0
        %284 = vperm.xlu0 %283, %v282
        %v285 = vpop.permute.xlu0 %284
        %vm286 = vcmp.eq.s32.totalorder %v285, 1
        %v287 = vsel %vm286, %v259, 0.0
        %289 = vrot.lane.b32.xlu0 %v287, 64
        %v290 = vpop.permute.xlu0 %289
        %v292 = vadd.f32 %v280, %v290
        %vm293 = vcmp.eq.s32.totalorder %v227, 3
        %v294 = vsel %vm293, 1, 0
        %295 = vset.pattern.permute.xlu0 0
        %296 = vperm.xlu0 %295, %v294
        %v297 = vpop.permute.xlu0 %296
        %vm298 = vcmp.eq.s32.totalorder %v297, 1
        %v299 = vsel %vm298, %v259, 0.0
        %301 = vrot.lane.b32.xlu0 %v299, 32
        %v302 = vpop.permute.xlu0 %301
        %v304 = vadd.f32 %v292, %v302
        %305 = vst.msk [vmem:[%s218] sm:$0xff] %vm237, %v304
        %s306 = sand.u32 %s121, 1
        %s307 = scalar_lea.sflag [#allocation4], %s306
        %s308 = sand.u32 %s121, 1
        %s309 = smul.addr %s308, 8
        %s310 = scalar_lea.vmem [#allocation5], %s309
        // Predicated region
        $region41: #{tpu_custom_call.1} parent=35 // pred_check
          %p311 = pneg %p131
        $region42: #{tpu_custom_call.1} parent=35 // pred_check_branch
          %313 = sbr.rel (%p311) target = $region44
        $region43: #{tpu_custom_call.1} parent=35 // pred_region
          %315 = vsyncadd %s307, 0
          %s316 = smul.addr %s19, 8
          %s317 = scalar_lea.hbm %s4, %s316
          %s319 = sshll.u32 %s310, 4
          %s320 = int_to_ptr.vmem [resolvable:$true] %s319
          %s321 = sshll.u32 %s317, 4
          %s322 = int_to_ptr.hbm [resolvable:$true] %s321
          %324 = dma.vmem_to_hbm [thread:$0]  %s320, 128, %s322, %s307
        $region44: #{tpu_custom_call.1} parent=35 // pred_fallthru
          _
      $region36: #{tpu_custom_call.1} parent=5 // pred_fallthru
        _
      %p325 = scmp.le.s32.totalorder 2, %s14
      // Predicated region
      $region45: #{tpu_custom_call.1} parent=5 // pred_check
        %p326 = pneg %p325
      $region46: #{tpu_custom_call.1} parent=5 // pred_check_branch
        %328 = sbr.rel (%p326) target = $region48
      $region47: #{tpu_custom_call.1} parent=5 // pred_region
        %s329 = ssub.s32 %s14, 2
        // Predicated region
        $region49: #{tpu_custom_call.1} parent=47 // pred_check
          %p330 = pneg %p137
        $region50: #{tpu_custom_call.1} parent=47 // pred_check_branch
          %332 = sbr.rel (%p330) target = $region52
        $region51: #{tpu_custom_call.1} parent=47 // pred_region
          %s333 = sand.u32 %s122, 1
          %s334 = scalar_lea.sflag [#allocation4], %s333
          %s335 = sand.u32 %s122, 1
          %s336 = smul.addr %s335, 8
          %s337 = scalar_lea.vmem [#allocation5], %s336
          %339 = dma.done %s334, 128
        $region52: #{tpu_custom_call.1} parent=47 // pred_fallthru
          _
      $region48: #{tpu_custom_call.1} parent=5 // pred_fallthru
        _
    $region6: #{tpu_custom_call.1} parent=1 // loop_footer
      %s18 = sadd.s32 1, %s14
    $region7: #{tpu_custom_call.1} parent=1 // loop_footer_branch
      %13 = sbr.rel target = $region3
    $region8: #{tpu_custom_call.1} parent=1 // loop_exit
      _
    %340 = vsyncpa [#allocation3], 1
    %s341 = scalar_lea.sflag [#allocation3], 1
    %342 = vsyncpa %s341, 1
    %343 = vsyncpa [#allocation4], 1
    %s344 = scalar_lea.sflag [#allocation4], 1
    %345 = vsyncpa %s344, 1

</llo_original>
